<compile_context>
chip_gen: v7x
topology: tpu7x:2x2x1
jax: 0.10.0
libtpu: 0.0.40
codegen_flags: <defaults>
</compile_context>

<pallas_src>
import functools

import jax
import jax.numpy as jnp
from jax.experimental import pallas as pl
from jax.experimental.pallas import tpu as pltpu


def _value_mlp_kernel(x_ref, w1_ref, b1_ref, w2_ref, b2_ref, o_ref, *,
                      vpu_layer2, tanh_in_bf16):
    # x_ref: (TB, n1) in natural layout (one contiguous DMA per tile).
    # Move batch into lanes with an in-kernel transpose: lands on the XLU slot,
    # which is idle while this memory-bound kernel waits on its DMAs.
    x_t = x_ref[...].T                                               # (n1, TB)

    # Layer 1 on the MXU, f32 accumulation; batch lives in the lane dimension.
    h = jnp.dot(w1_ref[...], x_t, preferred_element_type=jnp.float32)  # (n2, TB)
    pre = h + b1_ref[...].astype(jnp.float32)
    if tanh_in_bf16:
        # Optional: halves EUP transcendental pushes (v6e/v7x only; v5e has no bf16 EUP).
        h = jnp.tanh(pre.astype(jnp.bfloat16)).astype(jnp.float32)
    else:
        h = jnp.tanh(pre)                                            # EUP tanh, f32

    if vpu_layer2:
        # n3 == 1 value head: skip the MXU for a K=n2, N=1 matmul.
        # w2: (n2, 1) broadcasts over lanes (VPU mul) + sublane reduce (XLU).
        # b2: scalar read from SMEM.  Output tile (1, TB) is lane-dense.
        y = jnp.sum(h * w2_ref[...].astype(jnp.float32), axis=0, keepdims=True)
        y = y + b2_ref[0]
    else:
        # General n3: (n3, n2) @ (n2, TB) on the MXU; b2 is a (n3, 1) VMEM column.
        y = jnp.dot(w2_ref[...].astype(jnp.float32), h,
                    preferred_element_type=jnp.float32)
        y = y + b2_ref[...].astype(jnp.float32)                      # (n3, TB)

    o_ref[...] = y.astype(o_ref.dtype)


def _choose_tile_b(B, n1, n2, n3, x_itemsize, requested):
    """Pick the batch (lane) tile.

    Big tiles amortize the ~0.35us per-grid-step overhead, but the (tile_b, n1) x
    buffers are lane-padded to 128 lanes in VMEM, so size against the padded
    footprint.  Keep >= 2 grid steps once B is large so v7x megacore can shard.
    """
    if requested is not None:
        t = max(1, min(int(requested), B))
        if t < B:
            t = max(128, (t // 128) * 128)        # lane-aligned when actually tiling
        return t
    if B <= 1024:
        return B                                   # single tile; overhead-dominated anyway
    lane_pad = 128 * pl.cdiv(n1, 128)              # padded lane width of the x VMEM tile
    # bytes/row: double-buffered padded x + f32 x^T + f32 h/tanh + f32 out tiles.
    per_row = 2 * lane_pad * x_itemsize + 4 * (n1 + 2 * n2 + 2 * max(n3, 1))
    budget = 20 << 20                              # per-step VMEM budget, safe v5e..v7x
    cap = max(128, min(32768, (budget // per_row) // 128 * 128))
    half = max(128, (pl.cdiv(B, 2) // 128) * 128)  # keep >= 2 steps for v7x's 2 TCs
    return min(cap, half)


def valuefunction_forward(x, w1, b1, w2, b2, *, tile_b=None, tanh_in_bf16=False):
    """Forward of `valuefunction`: tanh(x @ w1.T + b1) @ w2.T + b2.

    x:  (B, n1)
    w1: (n2, n1)   b1: (n2,)     -- PyTorch nn.Linear layout (out, in)
    w2: (n3, n2)   b2: (n3,)
    returns (B, n3).  Works for f32 or bf16 x / weights (accumulation stays f32).
    """
    B, n1 = x.shape
    n2 = w1.shape[0]
    n3 = w2.shape[0]
    out_dtype = x.dtype
    x_item = jnp.dtype(x.dtype).itemsize
    w_item = jnp.dtype(w1.dtype).itemsize

    tile_b = _choose_tile_b(B, n1, n2, n3, x_item, tile_b)
    # Non-divisible boundary tile: reads of out-of-range rows are undefined, but there
    # is no batch-axis reduction and out-of-range output lanes are clipped, so it is
    # safe.  (Do NOT reuse this pattern if a batch reduction is ever added.)
    grid = (pl.cdiv(B, tile_b),)

    b1_col = b1.reshape(n2, 1)
    vpu_layer2 = (n3 == 1)
    if vpu_layer2:
        w2_arg = w2.reshape(n2, 1)                 # column for VPU broadcast over lanes
        b2_arg = b2.reshape(1)                     # scalar -> SMEM
        b2_spec = pl.BlockSpec(memory_space=pltpu.MemorySpace.SMEM)
    else:
        w2_arg = w2                                # (n3, n2) for the MXU path
        b2_arg = b2.reshape(n3, 1)
        b2_spec = pl.BlockSpec((n3, 1), lambda i: (0, 0))

    const = lambda i: (0, 0)                       # weights/biases stay VMEM-resident
    kernel = functools.partial(_value_mlp_kernel, vpu_layer2=vpu_layer2,
                               tanh_in_bf16=tanh_in_bf16)

    # Explicit scoped-VMEM limit (v5e default is only 16 MiB); account for lane padding.
    lane_pad = 128 * pl.cdiv(n1, 128)
    est = (2 * tile_b * lane_pad * x_item                       # double-buffered x tiles
           + tile_b * 4 * (n1 + 2 * n2 + 2 * max(n3, 1))        # x^T, h/tanh, out tiles
           + 4 * (n2 * n1 + n2 + n3 * n2 + n3))                 # resident weights
    vmem_limit = int(min(max(est + (8 << 20), 32 << 20), 48 << 20))

    cost = pl.CostEstimate(
        flops=2 * B * n1 * n2 + 2 * B * n2 * n3 + 4 * B * n2,
        transcendentals=B * n2,
        bytes_accessed=(B * n1 * x_item + B * n3 * jnp.dtype(out_dtype).itemsize
                        + (n2 * n1 + n2 + n3 * n2 + n3) * w_item),
    )

    out_nt = pl.pallas_call(
        kernel,
        out_shape=jax.ShapeDtypeStruct((n3, B), out_dtype),
        grid=grid,
        in_specs=[
            pl.BlockSpec((tile_b, n1), lambda i: (i, 0)),   # contiguous x tile, natural layout
            pl.BlockSpec((n2, n1), const),                  # W1 resident
            pl.BlockSpec((n2, 1), const),                   # b1 resident
            pl.BlockSpec(w2_arg.shape, const),              # W2 resident
            b2_spec,                                        # b2 (SMEM scalar or VMEM column)
        ],
        out_specs=pl.BlockSpec((n3, tile_b), lambda i: (0, i)),   # lane-dense output tiles
        compiler_params=pltpu.CompilerParams(
            dimension_semantics=("parallel",),              # shard batch tiles across TCs (v7x)
            vmem_limit_bytes=vmem_limit,
        ),
        cost_estimate=cost,
    )(x, w1, b1_col, w2_arg, b2_arg)

    # (n3, B) -> (B, n3).  For the common n3 == 1 value head this is a pure reshape;
    # for n3 > 1 it is a small strided pass over the (tiny) output only.
    return out_nt.T


def init_params(key, n1, n2, n3, dtype=jnp.float32):
    """Deterministic init mimicking nn.Linear's U(-1/sqrt(fan_in), 1/sqrt(fan_in)).

    Weights are returned in PyTorch layout: w1 (n2, n1), w2 (n3, n2).
    """
    k1, k2, k3, k4 = jax.random.split(key, 4)
    lim1 = 1.0 / (n1 ** 0.5)
    lim2 = 1.0 / (n2 ** 0.5)
    w1 = jax.random.uniform(k1, (n2, n1), dtype, -lim1, lim1)
    b1 = jax.random.uniform(k2, (n2,), dtype, -lim1, lim1)
    w2 = jax.random.uniform(k3, (n3, n2), dtype, -lim2, lim2)
    b2 = jax.random.uniform(k4, (n3,), dtype, -lim2, lim2)
    return w1, b1, w2, b2


def _ref_forward(x, w1, b1, w2, b2):
    return jnp.tanh(x @ w1.T + b1) @ w2.T + b2


if __name__ == "__main__":
    # FrozenLake-style shapes: n1=16 (one-hot state), n2=32 hidden, n3=1 value.
    B, n1, n2, n3 = 8, 16, 32, 1
    key = jax.random.PRNGKey(0)
    kx, kp = jax.random.split(key)
    x = jax.random.normal(kx, (B, n1), jnp.float32)
    w1, b1, w2, b2 = init_params(kp, n1, n2, n3)

    # Small-batch call (single tile, VPU layer-2 path, SMEM scalar bias).
    y = jax.block_until_ready(valuefunction_forward(x, w1, b1, w2, b2))
    assert y.shape == (B, n3)
    assert jnp.allclose(y, _ref_forward(x, w1, b1, w2, b2), atol=1e-5, rtol=1e-5)

    # Multi-step grid with a non-divisible boundary tile (grid = (3,), no padding pass).
    B2 = 300
    x2 = jax.random.normal(jax.random.PRNGKey(1), (B2, n1), jnp.float32)
    y2 = jax.block_until_ready(valuefunction_forward(x2, w1, b1, w2, b2, tile_b=128))
    assert y2.shape == (B2, n3)
    assert jnp.allclose(y2, _ref_forward(x2, w1, b1, w2, b2), atol=1e-5, rtol=1e-5)

    # Auto tile selection (>= 2 grid steps, "parallel" sharding across TCs on v7x).
    B3 = 4096
    x3 = jax.random.normal(jax.random.PRNGKey(2), (B3, n1), jnp.float32)
    y3 = jax.block_until_ready(valuefunction_forward(x3, w1, b1, w2, b2))
    assert y3.shape == (B3, n3)
    assert jnp.allclose(y3, _ref_forward(x3, w1, b1, w2, b2), atol=1e-5, rtol=1e-5)

    # General n3 > 1 head exercising the MXU layer-2 fallback path.
    n3b = 4
    w1b, b1b, w2b, b2b = init_params(jax.random.PRNGKey(3), n1, n2, n3b)
    y4 = jax.block_until_ready(valuefunction_forward(x, w1b, b1b, w2b, b2b))
    assert y4.shape == (B, n3b)
    assert jnp.allclose(y4, _ref_forward(x, w1b, b1b, w2b, b2b), atol=1e-5, rtol=1e-5)

    print("KERNEL_OK")
</pallas_src>

<mosaic_0001>
module attributes {stable_mosaic.version = 11 : i64} {
  func.func @_value_mlp_kernel(%arg0: i32, %arg1: memref<8x16xf32, #tpu.memory_space<vmem>>, %arg2: memref<32x16xf32, #tpu.memory_space<vmem>>, %arg3: memref<32x1xf32, #tpu.memory_space<vmem>>, %arg4: memref<32x1xf32, #tpu.memory_space<vmem>>, %arg5: memref<1xf32, #tpu.memory_space<smem>>, %arg6: memref<1x8xf32, #tpu.memory_space<vmem>>) attributes {dimension_semantics = [#tpu.dimension_semantics<parallel>], iteration_bounds = array<i64: 1>, scalar_prefetch = 0 : i64, scratch_operands = 0 : i64, tpu.core_type = #tpu.core_type<tc>, window_params = [{transform_indices = @transform_0, window_bounds = array<i64: 8, 16>}, {pipeline_mode = #tpu.pipeline_mode<synchronous>, transform_indices = @transform_1, window_bounds = array<i64: 32, 16>}, {pipeline_mode = #tpu.pipeline_mode<synchronous>, transform_indices = @transform_2, window_bounds = array<i64: 32, 1>}, {pipeline_mode = #tpu.pipeline_mode<synchronous>, transform_indices = @transform_3, window_bounds = array<i64: 32, 1>}, {transform_indices = @transform_4, window_bounds = array<i64: 1>}, {transform_indices = @transform_5, window_bounds = array<i64: 1, 8>}]} {
    %c0 = arith.constant 0 : index
    %c0_0 = arith.constant 0 : index
    %0 = vector.load %arg1[%c0, %c0_0] : memref<8x16xf32, #tpu.memory_space<vmem>>, vector<8x16xf32>
    %1 = tpu.transpose %0, [1, 0] : vector<8x16xf32> -> vector<16x8xf32>
    %c0_1 = arith.constant 0 : index
    %c0_2 = arith.constant 0 : index
    %2 = vector.load %arg2[%c0_1, %c0_2] : memref<32x16xf32, #tpu.memory_space<vmem>>, vector<32x16xf32>
    %cst = arith.constant dense<0.000000e+00> : vector<32x8xf32>
    %3 = tpu.matmul %2, %1, %cst {dimension_numbers = #tpu.dot_dimension_numbers<[1], [0], [0], [1], [0, 0, 1, 1], [], []>} : vector<32x16xf32>, vector<16x8xf32>, vector<32x8xf32> -> vector<32x8xf32>
    %c0_3 = arith.constant 0 : index
    %c0_4 = arith.constant 0 : index
    %4 = vector.load %arg3[%c0_3, %c0_4] : memref<32x1xf32, #tpu.memory_space<vmem>>, vector<32x1xf32>
    %5 = vector.broadcast %4 : vector<32x1xf32> to vector<32x8xf32>
    %6 = arith.addf %3, %5 : vector<32x8xf32>
    %7 = math.tanh %6 : vector<32x8xf32>
    %c0_5 = arith.constant 0 : index
    %c0_6 = arith.constant 0 : index
    %8 = vector.load %arg4[%c0_5, %c0_6] : memref<32x1xf32, #tpu.memory_space<vmem>>, vector<32x1xf32>
    %9 = vector.broadcast %8 : vector<32x1xf32> to vector<32x8xf32>
    %10 = arith.mulf %7, %9 : vector<32x8xf32>
    %cst_7 = arith.constant dense<0.000000e+00> : vector<8xf32>
    %11 = vector.multi_reduction <add>, %10, %cst_7 [0] : vector<32x8xf32> to vector<8xf32>
    %12 = vector.shape_cast %11 : vector<8xf32> to vector<1x8xf32>
    %c0_8 = arith.constant 0 : index
    %13 = memref.load %arg5[%c0_8] : memref<1xf32, #tpu.memory_space<smem>>
    %14 = vector.broadcast %13 : f32 to vector<1x8xf32>
    %15 = arith.addf %12, %14 : vector<1x8xf32>
    %c0_9 = arith.constant 0 : index
    %c0_10 = arith.constant 0 : index
    %16 = vector.load %arg6[%c0_9, %c0_10] : memref<1x8xf32, #tpu.memory_space<vmem>>, vector<1x8xf32>
    tpu.vector_store %arg6[%c0_9, %c0_10], %15 {strides = array<i32>} : memref<1x8xf32, #tpu.memory_space<vmem>>, vector<1x8xf32>,
    return
  }
  func.func @transform_0(%arg0: i32) -> (i32, i32) {
    %c0_i32 = arith.constant 0 : i32
    %c0_i32_0 = arith.constant 0 : i32
    return %arg0, %c0_i32 : i32, i32
  }
  func.func @transform_1(%arg0: i32) -> (i32, i32) {
    %c0_i32 = arith.constant 0 : i32
    %c0_i32_0 = arith.constant 0 : i32
    %c0_i32_1 = arith.constant 0 : i32
    return %c0_i32, %c0_i32_0 : i32, i32
  }
  func.func @transform_2(%arg0: i32) -> (i32, i32) {
    %c0_i32 = arith.constant 0 : i32
    %c0_i32_0 = arith.constant 0 : i32
    %c0_i32_1 = arith.constant 0 : i32
    return %c0_i32, %c0_i32_0 : i32, i32
  }
  func.func @transform_3(%arg0: i32) -> (i32, i32) {
    %c0_i32 = arith.constant 0 : i32
    %c0_i32_0 = arith.constant 0 : i32
    %c0_i32_1 = arith.constant 0 : i32
    return %c0_i32, %c0_i32_0 : i32, i32
  }
  func.func @transform_4(%arg0: i32) -> i32 {
    %c0_i32 = arith.constant 0 : i32
    %c0_i32_0 = arith.constant 0 : i32
    return %c0_i32 : i32
  }
  func.func @transform_5(%arg0: i32) -> (i32, i32) {
    %c0_i32 = arith.constant 0 : i32
    %c0_i32_0 = arith.constant 0 : i32
    return %c0_i32, %arg0 : i32, i32
  }
}

</mosaic_0001>

<llo_original>
// kernel: tpu_custom_call.1
$region0: #{tpu_custom_call.1}
  #allocation0 [shape = 'u32[]', space=smem, size = 0x4, offset = 0x4, fixed_abs, tag = 'smem constant byte address 0x4 - core index']
  #allocation1 [shape = 'u32[144,128]{1,0:T(1,128)}', space=vmem, size = 0x12000, scoped, tag = 'internal scratch']
  #allocation2 [shape = 'f32[1]{0:T(128)S(6)}', space=smem, size = 0x200, scoped, tag = 'scoped memory for tpu_custom_call.1']
  %s0 = inlined_call_operand.vmem [shape: f32[8,16], index: 0, kind: input, shape index: {}]
  %s1 = inlined_call_operand.vmem [shape: f32[32,16], index: 1, kind: input, shape index: {}]
  %s2 = inlined_call_operand.vmem [shape: f32[32,1], index: 2, kind: input, shape index: {}]
  %s3 = inlined_call_operand.vmem [shape: f32[32,1], index: 3, kind: input, shape index: {}]
  %s4 = inlined_call_operand.<no memory space> [shape: f32[1], index: 4, kind: input, shape index: {}]
  %s5 = inlined_call_operand.hbm [shape: f32[1,8], index: 5, kind: output, shape index: {}]
  %s6 = sld [smem:[#allocation0]]
  $region30: #{tpu_custom_call.1} parent=0
    _
  %s8 = ssub.s32 1, %s6
  %s9 = scalar_select 0, %s8, %s6
  %10 = sst [smem:[#allocation2]] %s4
  $region1: #{tpu_custom_call.1} parent=0
    #allocation3 [shape = 'u8[512]{0}', space=vmem, size = 0x400, scoped, tag = 'output window, operand 0, single buffered']
    #allocation4 [shape = 's32[1]{0}', space=sflag, size = 0x4, scoped, tag = 'scoped memory for tpu_custom_call.1']
    %11 = vsyncpa [#allocation4], 0
    // Predicated region
    $region2: #{tpu_custom_call.1} parent=1 // pred_check
      _
    $region3: #{tpu_custom_call.1} parent=1 // pred_check_branch
      %13 = sbr.rel (0) target = $region5
    $region4: #{tpu_custom_call.1} parent=1 // pred_region
      _
    $region5: #{tpu_custom_call.1} parent=1 // pred_fallthru
      _
    // Predicated region
    $region6: #{tpu_custom_call.1} parent=1 // pred_check
      _
    $region7: #{tpu_custom_call.1} parent=1 // pred_check_branch
      %15 = sbr.rel (0) target = $region9
    $region8: #{tpu_custom_call.1} parent=1 // pred_region
      _
    $region9: #{tpu_custom_call.1} parent=1 // pred_fallthru
      _
    // Predicated region
    $region10: #{tpu_custom_call.1} parent=1 // pred_check
      _
    $region11: #{tpu_custom_call.1} parent=1 // pred_check_branch
      %17 = sbr.rel (0) target = $region13
    $region12: #{tpu_custom_call.1} parent=1 // pred_region
      _
    $region13: #{tpu_custom_call.1} parent=1 // pred_fallthru
      _
    // Predicated region
    $region14: #{tpu_custom_call.1} parent=1 // pred_check
      _
    $region15: #{tpu_custom_call.1} parent=1 // pred_check_branch
      %19 = sbr.rel (0) target = $region17
    $region16: #{tpu_custom_call.1} parent=1 // pred_region
      _
    $region17: #{tpu_custom_call.1} parent=1 // pred_fallthru
      _
    // Predicated region
    $region18: #{tpu_custom_call.1} parent=1 // pred_check
      _
    $region19: #{tpu_custom_call.1} parent=1 // pred_check_branch
      %21 = sbr.rel (0) target = $region21
    $region20: #{tpu_custom_call.1} parent=1 // pred_region
      _
    $region21: #{tpu_custom_call.1} parent=1 // pred_fallthru
      _
    %v22 = vld [vmem:[%s0] sm:$0xff]
    %v23 = vld [vmem:[%s1] sm:$0xff]
    %v24 = vld [vmem:[%s1 + $0x8] sm:$0xff]
    %v25 = vld [vmem:[%s1 + $0x10] sm:$0xff]
    %v26 = vld [vmem:[%s1 + $0x18] sm:$0xff]
    %v27 = vld [vmem:[%s2] sm:$0xff]
    %v28 = vld [vmem:[%s2 + $0x8] sm:$0xff]
    %v29 = vld [vmem:[%s2 + $0x10] sm:$0xff]
    %v30 = vld [vmem:[%s2 + $0x18] sm:$0xff]
    %32 = vset.pattern.permute.xlu0 0
    %33 = vperm.xlu0 %32, %v27
    %v34 = vpop.permute.xlu0 %33
    %37 = vset.pattern.permute.xlu0 0
    %38 = vperm.xlu0 %37, %v28
    %v39 = vpop.permute.xlu0 %38
    %42 = vset.pattern.permute.xlu0 0
    %43 = vperm.xlu0 %42, %v29
    %v44 = vpop.permute.xlu0 %43
    %47 = vset.pattern.permute.xlu0 0
    %48 = vperm.xlu0 %47, %v30
    %v49 = vpop.permute.xlu0 %48
    %vm51 = vcmask 130048
    %v53 = vsel %vm51, %v23, 0
    %v56 = vsel %vm51, %v24, 0
    %v59 = vsel %vm51, %v25, 0
    %v62 = vsel %vm51, %v26, 0
    %v65 = vsel %vm51, %v22, 0
    %67 = vmatprep.subr.mxu0 0.0
    %68 = vmatpush1.xpose.msra.mxu0 %v65
    %69 = vmatprep.subr.mxu0 0.0
    %70 = vmatpush1.xpose.msra.mxu0 0.0
    %71 = vmatprep.subr.mxu0 0.0
    %72 = vmatpush1.xpose.msra.mxu0 0.0
    %73 = vmatprep.subr.mxu0 0.0
    %74 = vmatpush1.xpose.msra.mxu0 0.0
    %75 = vmatprep.subr.mxu0 0.0
    %76 = vmatpush1.xpose.msra.mxu0 0.0
    %77 = vmatprep.subr.mxu0 0.0
    %78 = vmatpush1.xpose.msra.mxu0 0.0
    %79 = vmatprep.subr.mxu0 0.0
    %80 = vmatpush1.xpose.msra.mxu0 0.0
    %81 = vmatprep.subr.mxu0 0.0
    %82 = vmatpush1.xpose.msra.mxu0 0.0
    %83 = vmatprep.subr.mxu0 0.0
    %84 = vmatpush1.xpose.msra.mxu0 0.0
    %85 = vmatprep.subr.mxu0 0.0
    %86 = vmatpush1.xpose.msra.mxu0 0.0
    %87 = vmatprep.subr.mxu0 0.0
    %88 = vmatpush1.xpose.msra.mxu0 0.0
    %89 = vmatprep.subr.mxu0 0.0
    %90 = vmatpush1.xpose.msra.mxu0 0.0
    %91 = vmatprep.subr.mxu0 0.0
    %92 = vmatpush1.xpose.msra.mxu0 0.0
    %93 = vmatprep.subr.mxu0 0.0
    %94 = vmatpush1.xpose.msra.mxu0 0.0
    %95 = vmatprep.subr.mxu0 0.0
    %96 = vmatpush1.xpose.msra.mxu0 0.0
    %97 = vmatprep.subr.mxu0 0.0
    %98 = vmatpush1.xpose.msra.mxu0 0.0
    %99 = vmatprep.subr.mxu0 0.0
    %100 = vmatpush1.xpose.msra.mxu0 0.0
    %101 = vmatprep.subr.mxu0 0.0
    %102 = vmatpush1.xpose.msra.mxu0 0.0
    %103 = vmatprep.subr.mxu0 0.0
    %104 = vmatpush1.xpose.msra.mxu0 0.0
    %105 = vmatprep.subr.mxu0 0.0
    %106 = vmatpush1.xpose.msra.mxu0 0.0
    %107 = vmatprep.subr.mxu0 0.0
    %108 = vmatpush1.xpose.msra.mxu0 0.0
    %109 = vmatprep.subr.mxu0 0.0
    %110 = vmatpush1.xpose.msra.mxu0 0.0
    %111 = vmatprep.subr.mxu0 0.0
    %112 = vmatpush1.xpose.msra.mxu0 0.0
    %113 = vmatprep.subr.mxu0 0.0
    %114 = vmatpush1.xpose.msra.mxu0 0.0
    %115 = vmatprep.subr.mxu0 0.0
    %116 = vmatpush1.xpose.msra.mxu0 0.0
    %117 = vmatprep.subr.mxu0 0.0
    %118 = vmatpush1.xpose.msra.mxu0 0.0
    %119 = vmatprep.subr.mxu0 0.0
    %120 = vmatpush1.xpose.msra.mxu0 0.0
    %121 = vmatprep.subr.mxu0 0.0
    %122 = vmatpush1.xpose.msra.mxu0 0.0
    %123 = vmatprep.subr.mxu0 0.0
    %124 = vmatpush1.xpose.msra.mxu0 0.0
    %125 = vmatprep.subr.mxu0 0.0
    %126 = vmatpush1.xpose.msra.mxu0 0.0
    %127 = vmatprep.subr.mxu0 0.0
    %128 = vmatpush1.xpose.msra.mxu0 0.0
    %129 = vmatprep.subr.mxu0 0.0
    %130 = vmatpush1.xpose.msra.mxu0 0.0
    %131 = vmatprep.mubr.f32.mxu0 0.0
    %132 = vmatmul.mubr.f32.gmra.mrb[0].mxu0 %v53
    %v133 = vpop.f32.mrb[0].mxu0
    %v134 = vadd.f32 %v34, %v133
    %v135 = vpop.f32.mrb[0].mxu0
    %136 = vmatprep.mubr.f32.mxu0 0.0
    %137 = vmatmul.mubr.f32.gmra.mrb[0].mxu0 %v56
    %v138 = vpop.f32.mrb[0].mxu0
    %v139 = vadd.f32 %v39, %v138
    %v140 = vpop.f32.mrb[0].mxu0
    %141 = vmatprep.mubr.f32.mxu0 0.0
    %142 = vmatmul.mubr.f32.gmra.mrb[0].mxu0 %v59
    %v143 = vpop.f32.mrb[0].mxu0
    %v144 = vadd.f32 %v44, %v143
    %v145 = vpop.f32.mrb[0].mxu0
    %146 = vmatprep.mubr.f32.mxu0 0.0
    %147 = vmatmul.mubr.f32.gmra.mrb[0].mxu0 %v62
    %v148 = vpop.f32.mrb[0].mxu0
    %v149 = vadd.f32 %v49, %v148
    %v150 = vpop.f32.mrb[0].mxu0
    %151 = vdwg.mxu0
    %v152 = vtanh.pop %v134
    %v153 = vtanh.pop %v139
    %v154 = vtanh.pop %v144
    %v155 = vtanh.pop %v149
    %v156 = vld [vmem:[%s3] sm:$0xff]
    %v157 = vld [vmem:[%s3 + $0x8] sm:$0xff]
    %v158 = vld [vmem:[%s3 + $0x10] sm:$0xff]
    %v159 = vld [vmem:[%s3 + $0x18] sm:$0xff]
    %161 = vset.pattern.permute.xlu0 0
    %162 = vperm.xlu0 %161, %v156
    %v163 = vpop.permute.xlu0 %162
    %166 = vset.pattern.permute.xlu0 0
    %167 = vperm.xlu0 %166, %v157
    %v168 = vpop.permute.xlu0 %167
    %171 = vset.pattern.permute.xlu0 0
    %172 = vperm.xlu0 %171, %v158
    %v173 = vpop.permute.xlu0 %172
    %176 = vset.pattern.permute.xlu0 0
    %177 = vperm.xlu0 %176, %v159
    %v178 = vpop.permute.xlu0 %177
    %v180 = vmul.f32 %v152, %v163
    %v181 = vmul.f32 %v153, %v168
    %v182 = vmul.f32 %v154, %v173
    %v183 = vmul.f32 %v155, %v178
    %vm184 = vcmask 64512
    %v185 = vsel %vm184, %v180, 0.0
    %v186 = vsel %vm184, %v181, 0.0
    %v187 = vadd.f32 %v185, %v186
    %v188 = vsel %vm184, %v182, 0.0
    %v189 = vadd.f32 %v187, %v188
    %v190 = vsel %vm184, %v183, 0.0
    %v191 = vadd.f32 %v189, %v190
    %v192 = vrot.slane %v191, 4
    %v193 = vadd.f32 %v191, %v192
    %v194 = vrot.slane %v193, 2
    %v195 = vadd.f32 %v193, %v194
    %v196 = vrot.slane %v195, 1
    %v197 = vadd.f32 %v195, %v196
    %s198 = sld [smem:[#allocation2]]
    %v199 = vstv %s198
    %v200 = vadd.f32 %v197, %v199
    %vm201 = vcmask 57344
    %202 = vst.msk [vmem:[#allocation3] sm:$0x1] %vm201, %v200
    // Predicated region
    $region22: #{tpu_custom_call.1} parent=1 // pred_check
      _
    $region23: #{tpu_custom_call.1} parent=1 // pred_check_branch
      %204 = sbr.rel (0) target = $region25
    $region24: #{tpu_custom_call.1} parent=1 // pred_region
      %s206 = ssub.s32 16, 16
      %207 = vsyncadd [#allocation4], %s206
      %s209 = sshll.u32 [#allocation3], 4
      %s210 = int_to_ptr.vmem [resolvable:$true] %s209
      %212 = dma.vmem_to_hbm [thread:$0]  %s210, 16, %s5, [#allocation4]
    $region25: #{tpu_custom_call.1} parent=1 // pred_fallthru
      _
    // Predicated region
    $region26: #{tpu_custom_call.1} parent=1 // pred_check
      _
    $region27: #{tpu_custom_call.1} parent=1 // pred_check_branch
      %214 = sbr.rel (0) target = $region29
    $region28: #{tpu_custom_call.1} parent=1 // pred_region
      %215 = dma.done [#allocation4], 16
    $region29: #{tpu_custom_call.1} parent=1 // pred_fallthru
      _
    %216 = vsyncpa [#allocation4], 1

</llo_original>
